<compile_context>
chip_gen: v7x
topology: tpu7x:2x2x1
jax: 0.10.0
libtpu: 0.0.40
codegen_flags: <defaults>
</compile_context>

<pallas_src>
import jax
import jax.numpy as jnp
from jax.experimental import pallas as pl
from jax.experimental.pallas import tpu as pltpu


def _hbm_copy_kernel(x_hbm, o_hbm, sem):
    # Single HBM -> HBM DMA of the whole array.  No VMEM staging, no vregs.
    cp = pltpu.make_async_copy(x_hbm, o_hbm, sem)
    cp.start()
    cp.wait()


def _pallas_hbm_copy(x):
    """Materialized identity copy via one HBM->HBM async DMA (no grid)."""
    nbytes = x.size * jnp.dtype(x.dtype).itemsize
    return pl.pallas_call(
        _hbm_copy_kernel,
        out_shape=jax.ShapeDtypeStruct(x.shape, x.dtype),
        in_specs=[pl.BlockSpec(memory_space=pl.ANY)],
        out_specs=pl.BlockSpec(memory_space=pl.ANY),
        scratch_shapes=[pltpu.SemaphoreType.DMA(())],
        cost_estimate=pl.CostEstimate(
            flops=0, transcendentals=0, bytes_accessed=2 * nbytes
        ),
    )(x)


def unflatten(x, type="3d", *, force_copy=False):
    """Pallas/JAX equivalent of UnFlatten.forward.

    x: (B, C) array.  Returns (B, C, 1, 1, 1) if type=='3d' else (B, C, 1, 1).

    Default path is a metadata-only reshape (no data movement), matching
    torch's contiguous .view() semantics exactly.  `force_copy=True` opts into
    a materialized identity copy through a single HBM->HBM DMA Pallas kernel,
    returning a fresh buffer.
    """
    B, C = x.shape
    out_shape = (B, C, 1, 1, 1) if type == "3d" else (B, C, 1, 1)

    if not force_copy:
        # Fast path (and the correct "optimization" for this op): pure view.
        return x.reshape(out_shape)

    # Materialized-copy path: one HBM->HBM DMA, then a metadata-only reshape.
    y = _pallas_hbm_copy(x)
    return y.reshape(out_shape)


if __name__ == "__main__":
    key = jax.random.PRNGKey(0)

    # Small (B, C) flat inputs consistent with the module's forward.
    B, C = 2, 256
    x = jax.random.normal(key, (B, C), dtype=jnp.float32)

    # Default path: metadata-only reshape (what PyTorch .view() does).
    out_3d = unflatten(x, type="3d")
    out_2d = unflatten(x, type="2d")
    jax.block_until_ready(out_3d)
    jax.block_until_ready(out_2d)
    assert out_3d.shape == (B, C, 1, 1, 1)
    assert out_2d.shape == (B, C, 1, 1)
    assert jnp.array_equal(out_3d.reshape(B, C), x)
    assert jnp.array_equal(out_2d.reshape(B, C), x)

    # Materialized-copy path exercises the Pallas HBM->HBM DMA kernel.
    out_copy_3d = unflatten(x, type="3d", force_copy=True)
    out_copy_2d = unflatten(x, type="2d", force_copy=True)
    jax.block_until_ready(out_copy_3d)
    jax.block_until_ready(out_copy_2d)
    assert out_copy_3d.shape == (B, C, 1, 1, 1)
    assert out_copy_2d.shape == (B, C, 1, 1)
    assert jnp.array_equal(out_copy_3d.reshape(B, C), x)
    assert jnp.array_equal(out_copy_2d.reshape(B, C), x)

    # Non-128-divisible / odd shape: the DMA path has no lane-density or VMEM
    # tiling constraints, so it handles this directly (previously a fallback).
    B2, C2 = 3, 37
    x2 = jax.random.normal(jax.random.PRNGKey(0), (B2, C2), dtype=jnp.bfloat16)
    out_odd = unflatten(x2, type="2d", force_copy=True)
    jax.block_until_ready(out_odd)
    assert out_odd.shape == (B2, C2, 1, 1)
    assert jnp.array_equal(out_odd.reshape(B2, C2), x2)

    print("KERNEL_OK")
</pallas_src>

<mosaic_0001>
module attributes {stable_mosaic.version = 11 : i64} {
  func.func @_hbm_copy_kernel(%arg0: memref<2x256xf32, #tpu.memory_space<any>>, %arg1: memref<2x256xf32, #tpu.memory_space<any>>, %arg2: memref<!tpu.dma_semaphore, #tpu.memory_space<semaphore_mem>>) attributes {dimension_semantics = [], scalar_prefetch = 0 : i64, scratch_operands = 1 : i64, tpu.core_type = #tpu.core_type<tc>} {
    tpu.enqueue_dma source(%arg0 : memref<2x256xf32, #tpu.memory_space<any>>) target(%arg1 : memref<2x256xf32, #tpu.memory_space<any>>) target_semaphore(%arg2 : memref<!tpu.dma_semaphore, #tpu.memory_space<semaphore_mem>>)
    tpu.wait_dma2 semaphore(%arg2 : memref<!tpu.dma_semaphore, #tpu.memory_space<semaphore_mem>>) src(%arg0 : memref<2x256xf32, #tpu.memory_space<any>>) dst(%arg1 : memref<2x256xf32, #tpu.memory_space<any>>)
    return
  }
}

</mosaic_0001>

<llo_original>
// kernel: tpu_custom_call.1
$region0: #{tpu_custom_call.1}
  #allocation0 [shape = 'u32[]', space=smem, size = 0x4, offset = 0x4, fixed_abs, tag = 'smem constant byte address 0x4 - core index']
  #allocation1 [shape = 'u32[144,128]{1,0:T(1,128)}', space=vmem, size = 0x12000, scoped, tag = 'internal scratch']
  #allocation2 [shape = 's32[1]{0}', space=sflag, size = 0x4, scoped, tag = 'scratch operand']
  #allocation3 [shape = 's32[]', space=sflag, size = 0x4, offset = 0, fixed_abs, tag = 'sflag constant byte address 0x0 - dummy sync flag']
  #allocation4 [shape = 'u32[0]{0}', space=smem, size = 0, offset = 0, fixed_abs, tag = 'smem constant byte address 0x0 - null']
  %s0 = inlined_call_operand.hbm [shape: f32[2,256], index: 0, kind: input, shape index: {}]
  %s1 = inlined_call_operand.hbm [shape: f32[2,256], index: 1, kind: output, shape index: {}]
  %s2 = sld [smem:[#allocation0]]
  $region2: #{tpu_custom_call.1} parent=0
    _
  %s4 = ssub.s32 1, %s2
  %s5 = scalar_select 0, %s4, %s2
  %s7 = sshll.u32 1, 14
  %s8 = sxor.u32 4294967295, %s7
  %s11 = sshll.u32 3, 24
  %s12 = sxor.u32 4294967295, %s11
  %s13 = sand.u32 0, %s12
  %s15 = sor.u32 %s13, 0
  %18 = dma.general %s0, 64, %s1, [#allocation2], [#allocation3], [#allocation4], %s15, 0
  %s19 = smul.u32 2, 1
  %s20 = smul.u32 %s19, 2
  %s21 = sshll.u32 %s20, 4
  %22 = dma.done [#allocation2], %s21
  %23 = vsyncmov [#allocation2]
  %s24 = vpop.sfrf %23
  %p25 = scmp.eq.s32.totalorder %s24, 0
  %p26 = pneg %p25
  %28 = shalt.err (%p26)

</llo_original>
